<compile_context>
chip_gen: v7x
topology: tpu7x:2x2x1
jax: 0.10.0
libtpu: 0.0.40
codegen_flags: <defaults>
</compile_context>

<pallas_src>
import functools

import jax
import jax.numpy as jnp
from jax.experimental import pallas as pl
from jax.experimental.pallas import tpu as pltpu


_UNROLL_K = 8  # k <= this: fully unrolled extraction + single concatenated store


def _kmax_kernel(x_ref, o_ref, *, k, compute_dtype):
    """Top-k (descending) along the last axis of one tile of rows.

    x_ref: (tile_rows, L)  rows on sublanes, L on lanes.
    o_ref: (tile_rows, k)  natural layout (k << L, masked stores are cheap).
    """
    x = x_ref[...]
    if x.dtype != compute_dtype:
        x = x.astype(compute_dtype)

    if k == 1:
        o_ref[...] = jnp.max(x, axis=-1, keepdims=True).astype(o_ref.dtype)
        return

    _, L = x.shape
    # (1, L) lane iota; the compares broadcast it (no tile-sized int32 scratch).
    lane = jax.lax.broadcasted_iota(jnp.int32, (1, L), 1)
    if jnp.issubdtype(compute_dtype, jnp.floating):
        sentinel = jnp.array(-jnp.inf, dtype=compute_dtype)
    else:
        sentinel = jnp.array(jnp.iinfo(compute_dtype).min, dtype=compute_dtype)

    def extract_max(cur):
        m = jnp.max(cur, axis=-1, keepdims=True)                       # (rows, 1)
        # Mask exactly the FIRST occurrence of the current max so repeated
        # values behave like torch.topk.  Masking to the sentinel is still
        # correct when actual values equal the sentinel.
        first = jnp.min(jnp.where(cur == m, lane, L), axis=-1, keepdims=True)
        return m, jnp.where(lane == first, sentinel, cur)

    if k <= _UNROLL_K:
        # Small k: unroll, keep reduce results in natural (rows, 1) layout,
        # skip the masking reduce on the last step, and issue a single store.
        vals = []
        for _ in range(k - 1):
            m, x = extract_max(x)
            vals.append(m)
        vals.append(jnp.max(x, axis=-1, keepdims=True))
        o_ref[...] = jnp.concatenate(vals, axis=-1).astype(o_ref.dtype)
    else:
        # Large k: bound live ranges (single live copy of x) with fori_loop.
        def body(step, cur):
            m, nxt = extract_max(cur)
            o_ref[:, pl.ds(step, 1)] = m.astype(o_ref.dtype)
            return nxt

        x = jax.lax.fori_loop(0, k - 1, body, x)
        o_ref[:, pl.ds(k - 1, 1)] = (
            jnp.max(x, axis=-1, keepdims=True).astype(o_ref.dtype))


def _tpu_config():
    """Best-effort, trace-time TPU generation query (never raises)."""
    kind = ""
    try:
        kind = jax.devices()[0].device_kind.lower()
    except Exception:
        pass
    vmem_bytes = None
    try:
        vmem_bytes = int(pltpu.get_tpu_info().vmem_capacity_bytes)
    except Exception:
        vmem_bytes = None
    if vmem_bytes is None:
        # v5e / v6e: 128 MiB; v7x: 64 MiB per TensorCore.  Unknown -> conservative.
        vmem_bytes = (128 * 1024 * 1024
                      if ("v5" in kind or "v6" in kind) else 64 * 1024 * 1024)
    # bf16 VPU on v6e / v7x; v5e (and older) lack it -> upcast bf16 there.
    upcast_bf16 = any(t in kind for t in ("v5 lite", "v5e", "v5lite", "v4", "v3", "v2"))
    # 2 TensorCores per chip only on v7x -> worth splitting a 1-program grid.
    split_cores = ("v7" in kind) or ("tpu7" in kind)
    return vmem_bytes, upcast_bf16, split_cores


def _pick_compute_dtype(dtype, upcast_bf16):
    d = jnp.dtype(dtype)
    if jnp.issubdtype(d, jnp.integer):
        return jnp.dtype(jnp.int32)
    if d == jnp.dtype(jnp.bfloat16):
        return jnp.dtype(jnp.float32) if upcast_bf16 else d
    if d == jnp.dtype(jnp.float16):
        return jnp.dtype(jnp.float32)
    if jnp.issubdtype(d, jnp.floating):
        return d
    raise ValueError(f"KMaxPool: unsupported dtype {d}")


def _choose_tile_rows(rows, bytes_per_row, target_tile_bytes, split_cores):
    """Row tile: MiB-scale (HBM-roofline friendly), VMEM-bounded, multiple of 8."""
    t = max(8, (target_tile_bytes // max(bytes_per_row, 1)) // 8 * 8)
    tile = rows if rows <= t else t          # full extent, or multiple of 8
    # v7x only: turn a 1-program grid into 2 so the "parallel" axis can shard
    # across both TensorCores; skipped on single-TC v5e/v6e (pure overhead).
    if split_cores and rows > 16 and pl.cdiv(rows, tile) < 2:
        half = (((rows + 1) // 2) + 7) // 8 * 8
        tile = min(tile, half)
    return tile


def kmax_pool(x, k=1, *, tile_rows=None):
    """K-max pooling: x [N, C, L] -> [N, C*k] (top-k per (n, c), descending)."""
    N, C, L = x.shape
    if k < 1:
        raise ValueError(f"k must be >= 1, got {k}")
    if k > L:
        raise ValueError(f"k ({k}) must be <= L ({L}); torch.topk would raise")

    vmem_bytes, upcast_bf16, split_cores = _tpu_config()
    compute_dtype = _pick_compute_dtype(x.dtype, upcast_bf16)

    rows = N * C
    x2 = x.reshape(rows, L)

    in_itemsize = jnp.dtype(x.dtype).itemsize
    compute_itemsize = jnp.dtype(compute_dtype).itemsize

    # Generation-aware budgets: keep (2-3 buffered input tiles + ~4 working-set
    # copies in compute dtype) well inside scoped VMEM.
    if vmem_bytes >= 100 * 1024 * 1024:          # v5e / v6e (128 MiB)
        target_tile_bytes = 6 * 1024 * 1024
        vmem_limit = 96 * 1024 * 1024
    else:                                        # v7x (64 MiB per TensorCore)
        target_tile_bytes = 4 * 1024 * 1024
        vmem_limit = 44 * 1024 * 1024

    bytes_per_row = L * max(in_itemsize, compute_itemsize)
    if tile_rows is None:
        tile_rows = _choose_tile_rows(rows, bytes_per_row, target_tile_bytes,
                                      split_cores)
    grid = (pl.cdiv(rows, tile_rows),)
    # TODO(synk): for very long L (a single row tile of 8 rows exceeding the
    # VMEM budget) add a second "arbitrary" grid axis tiling L with a running
    # (tile_rows, k) top-k scratch merged per L-block (needs -inf masking of
    # the ragged L tail), instead of one (tile_rows, L) block.

    # k == 1 is a single XLU pass per tile -> pure DMA bound; a third input
    # buffer helps hide the inbound DMA behind the tiny compute.
    in_spec_kwargs = {}
    if k == 1 and grid[0] > 2:
        in_spec_kwargs["pipeline_mode"] = pl.Buffered(3)
    in_spec = pl.BlockSpec((tile_rows, L), lambda i: (i, 0), **in_spec_kwargs)

    cost = pl.CostEstimate(
        flops=3 * k * rows * L,
        transcendentals=0,
        bytes_accessed=rows * L * in_itemsize + rows * k * in_itemsize,
    )

    # The last (ragged) block relies on documented Pallas behavior: padded
    # input rows hold garbage but rows are independent, and out-of-bounds
    # output rows are dropped at writeback.
    out = pl.pallas_call(
        functools.partial(_kmax_kernel, k=k, compute_dtype=compute_dtype),
        out_shape=jax.ShapeDtypeStruct((rows, k), x.dtype),
        grid=grid,
        in_specs=[in_spec],
        out_specs=pl.BlockSpec((tile_rows, k), lambda i: (i, 0)),
        compiler_params=pltpu.CompilerParams(
            dimension_semantics=("parallel",),
            vmem_limit_bytes=vmem_limit,
        ),
        cost_estimate=cost,
    )(x2)

    # (rows, k) -> (N, C*k): per (n, c) the k maxima are contiguous, matching
    # torch.reshape(topk(x), (N, -1)).
    return out.reshape(N, C * k)


if __name__ == "__main__":
    keys = jax.random.split(jax.random.PRNGKey(0), 4)

    # Small case (module-scale shapes): single block, unrolled-k path.
    N, C, L, k = 2, 4, 16, 3
    x = jax.random.normal(keys[0], (N, C, L), dtype=jnp.float32)
    y = jax.block_until_ready(kmax_pool(x, k=k))
    ref = jax.lax.top_k(x, k)[0].reshape(N, C * k)
    assert y.shape == (N, C * k), y.shape
    assert jnp.array_equal(y, ref), "small-case mismatch"

    # Multi-block grid + ragged last block (tile_rows forced small so the test
    # exercises the grid/writeback path without a huge input).
    N2, C2, L2, k2 = 4, 325, 96, 2
    xb = jax.random.normal(keys[1], (N2, C2, L2), dtype=jnp.float32)
    yb = jax.block_until_ready(kmax_pool(xb, k=k2, tile_rows=256))
    refb = jax.lax.top_k(xb, k2)[0].reshape(N2, C2 * k2)
    assert jnp.array_equal(yb, refb), "ragged-block mismatch"

    # bf16 input (native compute on v6e/v7x, f32 upcast on v5e): exact, since
    # only max/compare/select of existing values is involved.
    xh = jax.random.normal(keys[2], (2, 8, 64), dtype=jnp.bfloat16)
    yh = jax.block_until_ready(kmax_pool(xh, k=2))
    refh = jax.lax.top_k(xh, 2)[0].reshape(2, 8 * 2)
    assert jnp.array_equal(yh, refh), "bf16 mismatch"

    # Large-k path (fori_loop carrying x), including repeated values.
    xk = jax.random.randint(keys[3], (2, 6, 24), minval=-5, maxval=5).astype(jnp.float32)
    yk = jax.block_until_ready(kmax_pool(xk, k=10))
    refk = jax.lax.top_k(xk, 10)[0].reshape(2, 6 * 10)
    assert jnp.array_equal(yk, refk), "large-k mismatch"

    print("KERNEL_OK")
</pallas_src>

<mosaic_0001>
module attributes {stable_mosaic.version = 11 : i64} {
  func.func @_kmax_kernel(%arg0: i32, %arg1: memref<8x16xf32, #tpu.memory_space<vmem>>, %arg2: memref<8x3xf32, #tpu.memory_space<vmem>>) attributes {dimension_semantics = [#tpu.dimension_semantics<parallel>], iteration_bounds = array<i64: 1>, scalar_prefetch = 0 : i64, scratch_operands = 0 : i64, tpu.core_type = #tpu.core_type<tc>, window_params = [{transform_indices = @transform_0, window_bounds = array<i64: 8, 16>}, {transform_indices = @transform_1, window_bounds = array<i64: 8, 3>}]} {
    %c0 = arith.constant 0 : index
    %c0_0 = arith.constant 0 : index
    %0 = vector.load %arg1[%c0, %c0_0] : memref<8x16xf32, #tpu.memory_space<vmem>>, vector<8x16xf32>
    %1 = tpu.iota {dimensions = array<i32: 1>} : vector<1x16xi32>
    %cst = arith.constant dense<0xFF800000> : vector<8xf32>
    %2 = vector.multi_reduction <maximumf>, %0, %cst [1] : vector<8x16xf32> to vector<8xf32>
    %3 = vector.shape_cast %2 : vector<8xf32> to vector<8x1xf32>
    %4 = vector.broadcast %3 : vector<8x1xf32> to vector<8x16xf32>
    %5 = arith.cmpf oeq, %0, %4 : vector<8x16xf32>
    %c16_i32 = arith.constant 16 : i32
    %6 = vector.shape_cast %1 : vector<1x16xi32> to vector<1x16xi32>
    %7 = vector.broadcast %6 : vector<1x16xi32> to vector<8x16xi32>
    %8 = vector.broadcast %c16_i32 : i32 to vector<8x16xi32>
    %9 = arith.select %5, %7, %8 : vector<8x16xi1>, vector<8x16xi32>
    %cst_1 = arith.constant dense<2147483647> : vector<8xi32>
    %10 = vector.multi_reduction <minsi>, %9, %cst_1 [1] : vector<8x16xi32> to vector<8xi32>
    %11 = vector.shape_cast %10 : vector<8xi32> to vector<8x1xi32>
    %12 = vector.broadcast %1 : vector<1x16xi32> to vector<8x16xi32>
    %13 = vector.broadcast %11 : vector<8x1xi32> to vector<8x16xi32>
    %14 = arith.cmpi eq, %12, %13 : vector<8x16xi32>
    %cst_2 = arith.constant 0xFF800000 : f32
    %15 = vector.broadcast %cst_2 : f32 to vector<8x16xf32>
    %16 = arith.select %14, %15, %0 : vector<8x16xi1>, vector<8x16xf32>
    %cst_3 = arith.constant dense<0xFF800000> : vector<8xf32>
    %17 = vector.multi_reduction <maximumf>, %16, %cst_3 [1] : vector<8x16xf32> to vector<8xf32>
    %18 = vector.shape_cast %17 : vector<8xf32> to vector<8x1xf32>
    %19 = vector.broadcast %18 : vector<8x1xf32> to vector<8x16xf32>
    %20 = arith.cmpf oeq, %16, %19 : vector<8x16xf32>
    %c16_i32_4 = arith.constant 16 : i32
    %21 = vector.shape_cast %1 : vector<1x16xi32> to vector<1x16xi32>
    %22 = vector.broadcast %21 : vector<1x16xi32> to vector<8x16xi32>
    %23 = vector.broadcast %c16_i32_4 : i32 to vector<8x16xi32>
    %24 = arith.select %20, %22, %23 : vector<8x16xi1>, vector<8x16xi32>
    %cst_5 = arith.constant dense<2147483647> : vector<8xi32>
    %25 = vector.multi_reduction <minsi>, %24, %cst_5 [1] : vector<8x16xi32> to vector<8xi32>
    %26 = vector.shape_cast %25 : vector<8xi32> to vector<8x1xi32>
    %27 = vector.broadcast %1 : vector<1x16xi32> to vector<8x16xi32>
    %28 = vector.broadcast %26 : vector<8x1xi32> to vector<8x16xi32>
    %29 = arith.cmpi eq, %27, %28 : vector<8x16xi32>
    %cst_6 = arith.constant 0xFF800000 : f32
    %30 = vector.broadcast %cst_6 : f32 to vector<8x16xf32>
    %31 = arith.select %29, %30, %16 : vector<8x16xi1>, vector<8x16xf32>
    %cst_7 = arith.constant dense<0xFF800000> : vector<8xf32>
    %32 = vector.multi_reduction <maximumf>, %31, %cst_7 [1] : vector<8x16xf32> to vector<8xf32>
    %33 = vector.shape_cast %32 : vector<8xf32> to vector<8x1xf32>
    %34 = tpu.concatenate %3, %18, %33 in 1 : vector<8x1xf32>, vector<8x1xf32>, vector<8x1xf32> -> vector<8x3xf32>
    %c0_8 = arith.constant 0 : index
    %c0_9 = arith.constant 0 : index
    %35 = vector.load %arg2[%c0_8, %c0_9] : memref<8x3xf32, #tpu.memory_space<vmem>>, vector<8x3xf32>
    tpu.vector_store %arg2[%c0_8, %c0_9], %34 {strides = array<i32>} : memref<8x3xf32, #tpu.memory_space<vmem>>, vector<8x3xf32>,
    return
  }
  func.func @transform_0(%arg0: i32) -> (i32, i32) {
    %c0_i32 = arith.constant 0 : i32
    %c0_i32_0 = arith.constant 0 : i32
    return %arg0, %c0_i32 : i32, i32
  }
  func.func @transform_1(%arg0: i32) -> (i32, i32) {
    %c0_i32 = arith.constant 0 : i32
    %c0_i32_0 = arith.constant 0 : i32
    return %arg0, %c0_i32 : i32, i32
  }
}

</mosaic_0001>

<llo_original>
// kernel: tpu_custom_call.1
$region0: #{tpu_custom_call.1}
  #allocation0 [shape = 'u32[]', space=smem, size = 0x4, offset = 0x4, fixed_abs, tag = 'smem constant byte address 0x4 - core index']
  #allocation1 [shape = 'u32[144,128]{1,0:T(1,128)}', space=vmem, size = 0x12000, scoped, tag = 'internal scratch']
  %s0 = inlined_call_operand.hbm [shape: f32[8,16], index: 0, kind: input, shape index: {}]
  %s1 = inlined_call_operand.vmem [shape: f32[8,3], index: 1, kind: output, shape index: {}]
  %s2 = sld [smem:[#allocation0]]
  $region18: #{tpu_custom_call.1} parent=0
    _
  %s4 = ssub.s32 1, %s2
  %s5 = scalar_select 0, %s4, %s2
  $region1: #{tpu_custom_call.1} parent=0
    #allocation2 [shape = 'u8[4096]{0}', space=vmem, size = 0x1000, scoped, tag = 'input window, operand 0, single buffered']
    #allocation3 [shape = 's32[1]{0}', space=sflag, size = 0x4, scoped, tag = 'scoped memory for tpu_custom_call.1']
    %6 = vsyncpa [#allocation3], 0
    // Predicated region
    $region2: #{tpu_custom_call.1} parent=1 // pred_check
      _
    $region3: #{tpu_custom_call.1} parent=1 // pred_check_branch
      %8 = sbr.rel (0) target = $region5
    $region4: #{tpu_custom_call.1} parent=1 // pred_region
      %s10 = ssub.s32 128, 128
      %11 = vsyncadd [#allocation3], %s10
      %s13 = sshll.u32 [#allocation2], 4
      %s14 = int_to_ptr.vmem [resolvable:$true] %s13
      %16 = dma.hbm_to_vmem [thread:$0]  %s0, 128, %s14, [#allocation3]
    $region5: #{tpu_custom_call.1} parent=1 // pred_fallthru
      _
    // Predicated region
    $region6: #{tpu_custom_call.1} parent=1 // pred_check
      _
    $region7: #{tpu_custom_call.1} parent=1 // pred_check_branch
      %18 = sbr.rel (0) target = $region9
    $region8: #{tpu_custom_call.1} parent=1 // pred_region
      %19 = dma.done [#allocation3], 128
    $region9: #{tpu_custom_call.1} parent=1 // pred_fallthru
      _
    %v20 = vld [vmem:[#allocation2] sm:$0xff]
    %v21 = vlaneseq
    %v22 = vand.u32 %v21, 127
    %vm23 = vcmask 130048
    %v24 = vsel %vm23, %v20, -inf
    %25 = vmax.xlane.f32.xlu0 %v24
    %v26 = vpop.xlane.xlu0 %25
    %vm27 = vcmp.eq.f32.partialorder %v20, %v26
    %v28 = vsel %vm27, %v22, 16
    %v29 = vsel %vm23, %v28, 2147483647
    %v30 = vand.u32 %v29, 65535
    %v31 = vshra.s32 %v29, 16
    %v32 = vcvt.s32.f32 %v30
    %v33 = vcvt.s32.f32 %v31
    %34 = vmin.xlane.f32.xlu0 %v33
    %v35 = vpop.xlane.xlu0 %34
    %vm36 = vcmp.eq.f32.partialorder %v33, %v35
    %v37 = vsel %vm36, %v32, inf
    %38 = vmin.xlane.f32.xlu0 %v37
    %v39 = vpop.xlane.xlu0 %38
    %v40 = vcvt.f32.s32 %v39
    %v41 = vcvt.f32.s32 %v35
    %v42 = vshll.u32 %v41, 16
    %v43 = vadd.s32 %v42, %v40
    %vm44 = vcmp.eq.s32.totalorder %v22, %v43
    %v45 = vsel %vm44, -inf, %v20
    %v46 = vsel %vm23, %v45, -inf
    %47 = vmax.xlane.f32.xlu0 %v46
    %v48 = vpop.xlane.xlu0 %47
    %vm49 = vcmp.eq.f32.partialorder %v45, %v48
    %v50 = vsel %vm49, %v22, 16
    %v51 = vsel %vm23, %v50, 2147483647
    %v52 = vand.u32 %v51, 65535
    %v53 = vshra.s32 %v51, 16
    %v54 = vcvt.s32.f32 %v52
    %v55 = vcvt.s32.f32 %v53
    %56 = vmin.xlane.f32.xlu0 %v55
    %v57 = vpop.xlane.xlu0 %56
    %vm58 = vcmp.eq.f32.partialorder %v55, %v57
    %v59 = vsel %vm58, %v54, inf
    %60 = vmin.xlane.f32.xlu0 %v59
    %v61 = vpop.xlane.xlu0 %60
    %v62 = vcvt.f32.s32 %v61
    %v63 = vcvt.f32.s32 %v57
    %v64 = vshll.u32 %v63, 16
    %v65 = vadd.s32 %v64, %v62
    %vm66 = vcmp.eq.s32.totalorder %v22, %v65
    %v67 = vsel %vm66, -inf, %v45
    %v68 = vsel %vm23, %v67, -inf
    %69 = vmax.xlane.f32.xlu0 %v68
    %v70 = vpop.xlane.xlu0 %69
    %vm71 = vcmask 7168
    %v72 = vsel %vm71, %v26, %v48
    %vm73 = vcmask 15360
    %v74 = vsel %vm73, %v72, %v70
    %vm75 = vcmask 23552
    %76 = vst.msk [vmem:[%s1] sm:$0xff] %vm75, %v74
    // Predicated region
    $region10: #{tpu_custom_call.1} parent=1 // pred_check
      _
    $region11: #{tpu_custom_call.1} parent=1 // pred_check_branch
      %78 = sbr.rel (0) target = $region13
    $region12: #{tpu_custom_call.1} parent=1 // pred_region
      _
    $region13: #{tpu_custom_call.1} parent=1 // pred_fallthru
      _
    // Predicated region
    $region14: #{tpu_custom_call.1} parent=1 // pred_check
      _
    $region15: #{tpu_custom_call.1} parent=1 // pred_check_branch
      %80 = sbr.rel (0) target = $region17
    $region16: #{tpu_custom_call.1} parent=1 // pred_region
      _
    $region17: #{tpu_custom_call.1} parent=1 // pred_fallthru
      _
    %81 = vsyncpa [#allocation3], 1

</llo_original>
